<compile_context>
chip_gen: v6e
topology: v6e:2x2x1
jax: 0.10.0
libtpu: 0.0.40
codegen_flags: <defaults>
</compile_context>

<pallas_src>
import jax
import jax.numpy as jnp
from jax.experimental import pallas as pl
from jax.experimental.pallas import tpu as pltpu


def _round_up(v, m):
    return ((v + m - 1) // m) * m


def _choose_row_tile(m8, max_tile=512, min_split=128):
    """Single full-height tile if it fits, else the largest divisor of m8 in
    [min_split, max_tile] (so no row padding), else max_tile (pad)."""
    if m8 <= max_tile:
        return m8
    for cand in range(max_tile, min_split - 1, -8):
        if m8 % cand == 0:
            return cand
    return max_tile


def _vmem_usable_bytes():
    """Per-generation scoped-VMEM budget with headroom for Mosaic internals."""
    try:
        cap = int(pltpu.get_tpu_info().vmem_capacity_bytes)
    except Exception:
        cap = 64 * 1024 * 1024  # conservative (v7x-sized) fallback
    # ~50 MiB on a 64 MiB part (v7x), ~100 MiB on a 128 MiB part (v5e/v6e).
    return max(16 << 20, min(cap - (12 << 20), int(0.78 * cap)))


# ----------------------------------------------------------------------------
# Kernels
# ----------------------------------------------------------------------------
def _regressor_kernel(x_ref, w_ref, b_ref, o_ref):
    """proj_tile = x_tile @ W + bias   (whole K resident)."""
    acc = jnp.dot(x_ref[...], w_ref[...], preferred_element_type=jnp.float32)
    o_ref[...] = (acc + b_ref[...]).astype(o_ref.dtype)


def _regressor_kernel_ktiled(x_ref, w_ref, b_ref, o_ref, acc_ref):
    """Same matmul with the contraction (K) tiled on the last grid axis."""
    kk = pl.program_id(1)

    @pl.when(kk == 0)
    def _():
        acc_ref[...] = jnp.zeros_like(acc_ref)

    acc_ref[...] += jnp.dot(x_ref[...], w_ref[...],
                            preferred_element_type=jnp.float32)

    @pl.when(kk == pl.num_programs(1) - 1)
    def _():
        o_ref[...] = (acc_ref[...] + b_ref[...]).astype(o_ref.dtype)


# ----------------------------------------------------------------------------
# pallas_call builder
# ----------------------------------------------------------------------------
def _call_regressor(x_flat, w2d, b2d, *, tm, tk, out_dtype, vmem_limit,
                    single_buffer_resident):
    m_pad, k_pad = x_flat.shape
    co_pad = w2d.shape[1]
    num_m = m_pad // tm
    num_k = k_pad // tk
    in_item = jnp.dtype(x_flat.dtype).itemsize
    out_item = jnp.dtype(out_dtype).itemsize

    cost = pl.CostEstimate(
        flops=2 * m_pad * k_pad * co_pad,
        transcendentals=0,
        bytes_accessed=(m_pad * k_pad * in_item + k_pad * co_pad * in_item
                        + co_pad * 4 + m_pad * co_pad * out_item))

    # Resident operands (constant index_map): single-buffer them if supported.
    res_kw = {"pipeline_mode": pl.Buffered(1)} if single_buffer_resident else {}

    if num_k == 1:
        grid = (num_m,)
        in_specs = [
            pl.BlockSpec((tm, k_pad), lambda i: (i, 0)),
            pl.BlockSpec((k_pad, co_pad), lambda i: (0, 0), **res_kw),
            pl.BlockSpec((1, co_pad), lambda i: (0, 0), **res_kw),
        ]
        out_specs = pl.BlockSpec((tm, co_pad), lambda i: (i, 0))
        kernel = _regressor_kernel
        scratch_shapes = ()
        dims = ("parallel",)
    else:
        grid = (num_m, num_k)
        in_specs = [
            pl.BlockSpec((tm, tk), lambda i, kk: (i, kk)),
            pl.BlockSpec((tk, co_pad), lambda i, kk: (kk, 0)),
            pl.BlockSpec((1, co_pad), lambda i, kk: (0, 0), **res_kw),
        ]
        out_specs = pl.BlockSpec((tm, co_pad), lambda i, kk: (i, 0))
        kernel = _regressor_kernel_ktiled
        scratch_shapes = (pltpu.VMEM((tm, co_pad), jnp.float32),)
        dims = ("parallel", "arbitrary")

    return pl.pallas_call(
        kernel,
        out_shape=jax.ShapeDtypeStruct((m_pad, co_pad), out_dtype),
        grid=grid,
        in_specs=in_specs,
        out_specs=out_specs,
        scratch_shapes=scratch_shapes,
        compiler_params=pltpu.CompilerParams(
            dimension_semantics=dims, vmem_limit_bytes=int(vmem_limit)),
        cost_estimate=cost,
    )(x_flat, w2d, b2d)


# ----------------------------------------------------------------------------
# XLA fallback / reference projection
# ----------------------------------------------------------------------------
def _conv_proj_xla(x, weight, bias, input_len, output_len):
    b, c, n, t = x.shape
    xl = x[..., t - input_len:]                                    # (B, C, N, L)
    conv = jnp.einsum('bcnl,ocl->bon', xl, weight[:, :, 0, :],
                      precision=jax.lax.Precision.HIGHEST)
    conv = conv + bias[None, :, None]                              # (B, Co, N)
    return jnp.transpose(conv.reshape(b, output_len, c, n), (0, 2, 3, 1))


# ----------------------------------------------------------------------------
# Public wrapper
# ----------------------------------------------------------------------------
def residual_extrapolate(x, weight, bias, input_len, output_len, *,
                         compute_dtype=None, use_pallas=None,
                         return_parts=False):
    """x: (B, C, N, T); weight: (C*P, C, 1, L); bias: (C*P,) -> (B, C, N, T+P)."""
    b, c, n, t = x.shape
    L, P = input_len, output_len
    co = c * P            # conv output channels
    k = c * L             # contraction size
    m = b * n             # independent (batch, node) rows
    out_dtype = x.dtype

    # Size-based dispatch: for tiny problems the fused XLA einsum beats the
    # pallas_call fixed overhead + layout plumbing.  Force with use_pallas=True.
    if use_pallas is None:
        use_pallas = (2 * m * k * co) >= (32 * 1024 * 1024)

    if not use_pallas:
        proj = _conv_proj_xla(x, weight, bias, L, P)
    else:
        # ---- layout plumbing (cheap, left to XLA) ----------------------------
        # TODO(synk): for very large B*N, fuse this slice+transpose into the
        # kernel via memory_space=pl.ANY + manual DMA to save one HBM pass.
        x_last = x[..., t - L:]                                    # (B, C, N, L)
        x_flat = jnp.transpose(x_last, (0, 2, 1, 3)).reshape(m, k)  # (B*N, C*L)
        w2d = jnp.transpose(weight.reshape(co, k), (1, 0))          # (K, Co)
        b2d = bias.reshape(1, co).astype(jnp.float32)

        if compute_dtype is not None and compute_dtype != x_flat.dtype:
            # bf16 operands halve DMA/VMEM; accumulation stays f32 on the MXU.
            x_flat = x_flat.astype(compute_dtype)
            w2d = w2d.astype(compute_dtype)
        in_item = jnp.dtype(x_flat.dtype).itemsize
        out_item = jnp.dtype(out_dtype).itemsize

        # Pad Co to a lane multiple -> unmasked, lane-dense output stores.
        co_pad = _round_up(co, 128)
        if co_pad != co:
            w2d = jnp.pad(w2d, ((0, 0), (0, co_pad - co)))
            b2d = jnp.pad(b2d, ((0, 0), (0, co_pad - co)))

        # Row tiling: single full-height tile unless M is large.
        m8 = _round_up(m, 8)
        tm = _choose_row_tile(m8)
        m_pad = _round_up(m8, tm)
        if m_pad != m:
            x_flat = jnp.pad(x_flat, ((0, m_pad - m), (0, 0)))

        vmem_usable = _vmem_usable_bytes()

        # Can the whole (K, Co) weight stay VMEM-resident? (budget weight at 2x
        # so the plan is still valid if Buffered(1) is ignored by this build)
        resident_need = (2 * tm * k * in_item          # x tile, double buffered
                         + 2 * k * co_pad * in_item    # weight (conservative)
                         + 2 * tm * co_pad * out_item  # out tile, double buffered
                         + 2 * co_pad * 4
                         + (4 << 20))                  # Mosaic internal slack
        if resident_need <= vmem_usable:
            tk = k
            k_pad = k
        else:
            # K-tiled path: accumulate over 128-multiple K chunks.
            tk = _round_up(min(k, 2048), 128)

            def _need(tk_):
                return (2 * tm * tk_ * in_item + 2 * tk_ * co_pad * in_item
                        + tm * co_pad * 4 + 2 * tm * co_pad * out_item
                        + 2 * co_pad * 4 + (4 << 20))

            while tk > 128 and _need(tk) > vmem_usable:
                tk = max(128, _round_up(tk // 2, 128))
            k_pad = _round_up(k, tk)
            if k_pad != k:
                x_flat = jnp.pad(x_flat, ((0, 0), (0, k_pad - k)))
                w2d = jnp.pad(w2d, ((0, k_pad - k), (0, 0)))

        try:
            proj_flat = _call_regressor(
                x_flat, w2d, b2d, tm=tm, tk=tk, out_dtype=out_dtype,
                vmem_limit=vmem_usable, single_buffer_resident=True)
        except Exception:
            # Older builds without BlockSpec.pipeline_mode support: fall back
            # to default double-buffered residents (same semantics).
            proj_flat = _call_regressor(
                x_flat, w2d, b2d, tm=tm, tk=tk, out_dtype=out_dtype,
                vmem_limit=vmem_usable, single_buffer_resident=False)

        proj_flat = proj_flat[:m, :co]                             # drop padding
        # (B*N, P*C) -> (B, N, P, C) -> (B, C, N, P)  (matches torch reshape+permute)
        proj = jnp.transpose(proj_flat.reshape(b, n, P, c), (0, 3, 1, 2))

    if return_parts:
        return x, proj
    # TODO(synk): for production, write proj into a caller-donated (B,C,N,T+P)
    # buffer (input_output_aliases) instead of re-copying all of x in a
    # lane-sparse concat; kept here to preserve the module's return signature.
    return jnp.concatenate([x, proj], axis=-1)                     # (B, C, N, T+P)


# ----------------------------------------------------------------------------
# Pure-JAX reference (mirrors the PyTorch forward)
# ----------------------------------------------------------------------------
def residual_extrapolate_ref(x, weight, bias, input_len, output_len):
    proj = _conv_proj_xla(x, weight, bias, input_len, output_len)
    return jnp.concatenate([x, proj], axis=-1)


if __name__ == "__main__":
    # small shapes consistent with the module:
    # d_model C=32, nodes N=16, seq T=12, input_len=8, output_len=4 -> Co=128
    B, C, N, T = 2, 32, 16, 12
    INPUT_LEN, OUTPUT_LEN = 8, 4

    key = jax.random.PRNGKey(0)
    kx, kw, kb = jax.random.split(key, 3)
    x = jax.random.normal(kx, (B, C, N, T), dtype=jnp.float32)
    weight = 0.1 * jax.random.normal(
        kw, (C * OUTPUT_LEN, C, 1, INPUT_LEN), dtype=jnp.float32)
    bias = 0.1 * jax.random.normal(kb, (C * OUTPUT_LEN,), dtype=jnp.float32)

    # Force the Pallas path (the auto-dispatch would pick the fused XLA einsum
    # for a problem this tiny).
    out = jax.block_until_ready(
        residual_extrapolate(x, weight, bias, INPUT_LEN, OUTPUT_LEN,
                             use_pallas=True))

    out_ref = residual_extrapolate_ref(x, weight, bias, INPUT_LEN, OUTPUT_LEN)
    assert out.shape == (B, C, N, T + OUTPUT_LEN)
    assert jnp.allclose(out, out_ref, atol=1e-3, rtol=1e-3)

    print("KERNEL_OK")
</pallas_src>

<mosaic_0001>
module attributes {stable_mosaic.version = 11 : i64} {
  func.func @_regressor_kernel(%arg0: i32, %arg1: memref<32x256xf32, #tpu.memory_space<vmem>>, %arg2: memref<256x128xf32, #tpu.memory_space<vmem>>, %arg3: memref<1x128xf32, #tpu.memory_space<vmem>>, %arg4: memref<32x128xf32, #tpu.memory_space<vmem>>) attributes {dimension_semantics = [#tpu.dimension_semantics<parallel>], iteration_bounds = array<i64: 1>, scalar_prefetch = 0 : i64, scratch_operands = 0 : i64, tpu.core_type = #tpu.core_type<tc>, window_params = [{transform_indices = @transform_0, window_bounds = array<i64: 32, 256>}, {pipeline_mode = #tpu.pipeline_mode<synchronous>, transform_indices = @transform_1, window_bounds = array<i64: 256, 128>}, {pipeline_mode = #tpu.pipeline_mode<synchronous>, transform_indices = @transform_2, window_bounds = array<i64: 1, 128>}, {transform_indices = @transform_3, window_bounds = array<i64: 32, 128>}]} {
    %c0 = arith.constant 0 : index
    %c0_0 = arith.constant 0 : index
    %0 = vector.load %arg1[%c0, %c0_0] : memref<32x256xf32, #tpu.memory_space<vmem>>, vector<32x256xf32>
    %c0_1 = arith.constant 0 : index
    %c0_2 = arith.constant 0 : index
    %1 = vector.load %arg2[%c0_1, %c0_2] : memref<256x128xf32, #tpu.memory_space<vmem>>, vector<256x128xf32>
    %cst = arith.constant dense<0.000000e+00> : vector<32x128xf32>
    %2 = tpu.matmul %0, %1, %cst {dimension_numbers = #tpu.dot_dimension_numbers<[1], [0], [0], [1], [0, 0, 1, 1], [], []>} : vector<32x256xf32>, vector<256x128xf32>, vector<32x128xf32> -> vector<32x128xf32>
    %c0_3 = arith.constant 0 : index
    %c0_4 = arith.constant 0 : index
    %3 = vector.load %arg3[%c0_3, %c0_4] : memref<1x128xf32, #tpu.memory_space<vmem>>, vector<1x128xf32>
    %4 = vector.broadcast %3 : vector<1x128xf32> to vector<32x128xf32>
    %5 = arith.addf %2, %4 : vector<32x128xf32>
    %c0_5 = arith.constant 0 : index
    %c0_6 = arith.constant 0 : index
    %6 = vector.load %arg4[%c0_5, %c0_6] : memref<32x128xf32, #tpu.memory_space<vmem>>, vector<32x128xf32>
    tpu.vector_store %arg4[%c0_5, %c0_6], %5 {strides = array<i32>} : memref<32x128xf32, #tpu.memory_space<vmem>>, vector<32x128xf32>,
    return
  }
  func.func @transform_0(%arg0: i32) -> (i32, i32) {
    %c0_i32 = arith.constant 0 : i32
    %c0_i32_0 = arith.constant 0 : i32
    return %arg0, %c0_i32 : i32, i32
  }
  func.func @transform_1(%arg0: i32) -> (i32, i32) {
    %c0_i32 = arith.constant 0 : i32
    %c0_i32_0 = arith.constant 0 : i32
    %c0_i32_1 = arith.constant 0 : i32
    return %c0_i32, %c0_i32_0 : i32, i32
  }
  func.func @transform_2(%arg0: i32) -> (i32, i32) {
    %c0_i32 = arith.constant 0 : i32
    %c0_i32_0 = arith.constant 0 : i32
    %c0_i32_1 = arith.constant 0 : i32
    return %c0_i32, %c0_i32_0 : i32, i32
  }
  func.func @transform_3(%arg0: i32) -> (i32, i32) {
    %c0_i32 = arith.constant 0 : i32
    %c0_i32_0 = arith.constant 0 : i32
    return %arg0, %c0_i32 : i32, i32
  }
}

module attributes {stable_mosaic.version = 11 : i64} {
  func.func @_regressor_kernel(%arg0: i32, %arg1: memref<32x256xf32, #tpu.memory_space<vmem>>, %arg2: memref<256x128xf32, #tpu.memory_space<vmem>>, %arg3: memref<1x128xf32, #tpu.memory_space<vmem>>, %arg4: memref<32x128xf32, #tpu.memory_space<vmem>>) attributes {dimension_semantics = [#tpu.dimension_semantics<parallel>], iteration_bounds = array<i64: 1>, scalar_prefetch = 0 : i64, scratch_operands = 0 : i64, tpu.core_type = #tpu.core_type<tc>, window_params = [{transform_indices = @transform_0, window_bounds = array<i64: 32, 256>}, {pipeline_mode = #tpu.pipeline_mode<synchronous>, transform_indices = @transform_1, window_bounds = array<i64: 256, 128>}, {pipeline_mode = #tpu.pipeline_mode<synchronous>, transform_indices = @transform_2, window_bounds = array<i64: 1, 128>}, {transform_indices = @transform_3, window_bounds = array<i64: 32, 128>}]} {
    %c0 = arith.constant 0 : index
    %c0_0 = arith.constant 0 : index
    %0 = vector.load %arg1[%c0, %c0_0] : memref<32x256xf32, #tpu.memory_space<vmem>>, vector<32x256xf32>
    %c0_1 = arith.constant 0 : index
    %c0_2 = arith.constant 0 : index
    %1 = vector.load %arg2[%c0_1, %c0_2] : memref<256x128xf32, #tpu.memory_space<vmem>>, vector<256x128xf32>
    %cst = arith.constant dense<0.000000e+00> : vector<32x128xf32>
    %2 = tpu.matmul %0, %1, %cst {dimension_numbers = #tpu.dot_dimension_numbers<[1], [0], [0], [1], [0, 0, 1, 1], [], []>} : vector<32x256xf32>, vector<256x128xf32>, vector<32x128xf32> -> vector<32x128xf32>
    %c0_3 = arith.constant 0 : index
    %c0_4 = arith.constant 0 : index
    %3 = vector.load %arg3[%c0_3, %c0_4] : memref<1x128xf32, #tpu.memory_space<vmem>>, vector<1x128xf32>
    %4 = vector.broadcast %3 : vector<1x128xf32> to vector<32x128xf32>
    %5 = arith.addf %2, %4 : vector<32x128xf32>
    %c0_5 = arith.constant 0 : index
    %c0_6 = arith.constant 0 : index
    %6 = vector.load %arg4[%c0_5, %c0_6] : memref<32x128xf32, #tpu.memory_space<vmem>>, vector<32x128xf32>
    tpu.vector_store %arg4[%c0_5, %c0_6], %5 {strides = array<i32>} : memref<32x128xf32, #tpu.memory_space<vmem>>, vector<32x128xf32>,
    return
  }
  func.func @transform_0(%arg0: i32) -> (i32, i32) {
    %c0_i32 = arith.constant 0 : i32
    %c0_i32_0 = arith.constant 0 : i32
    return %arg0, %c0_i32 : i32, i32
  }
  func.func @transform_1(%arg0: i32) -> (i32, i32) {
    %c0_i32 = arith.constant 0 : i32
    %c0_i32_0 = arith.constant 0 : i32
    %c0_i32_1 = arith.constant 0 : i32
    return %c0_i32, %c0_i32_0 : i32, i32
  }
  func.func @transform_2(%arg0: i32) -> (i32, i32) {
    %c0_i32 = arith.constant 0 : i32
    %c0_i32_0 = arith.constant 0 : i32
    %c0_i32_1 = arith.constant 0 : i32
    return %c0_i32, %c0_i32_0 : i32, i32
  }
  func.func @transform_3(%arg0: i32) -> (i32, i32) {
    %c0_i32 = arith.constant 0 : i32
    %c0_i32_0 = arith.constant 0 : i32
    return %arg0, %c0_i32 : i32, i32
  }
}

</mosaic_0001>

<llo_original>
// kernel: tpu_custom_call.1
$region0: #{tpu_custom_call.1}
  #allocation0 [shape = 'u32[]', space=smem, size = 0x4, offset = 0x4, fixed_abs, tag = 'smem constant byte address 0x4 - core index']
  #allocation1 [shape = 'u32[144,128]{1,0:T(1,128)}', space=vmem, size = 0x12000, scoped, tag = 'internal scratch']
  %s0 = inlined_call_operand.hbm [shape: f32[32,256], index: 0, kind: input, shape index: {}]
  %s1 = inlined_call_operand.hbm [shape: f32[256,128], index: 1, kind: input, shape index: {}]
  %s2 = inlined_call_operand.vmem [shape: f32[1,128], index: 2, kind: input, shape index: {}]
  %s3 = inlined_call_operand.hbm [shape: f32[32,128], index: 3, kind: output, shape index: {}]
  %s4 = sld [smem:[#allocation0]]
  $region30: #{tpu_custom_call.1} parent=0
    _
  %s6 = ssub.s32 1, %s4
  %s7 = scalar_select 0, %s6, %s4
  $region1: #{tpu_custom_call.1} parent=0
    #allocation2 [shape = 'u8[32768]{0}', space=vmem, size = 0x8000, scoped, tag = 'input window, operand 0, single buffered']
    #allocation3 [shape = 's32[1]{0}', space=sflag, size = 0x4, scoped, tag = 'scoped memory for tpu_custom_call.1']
    #allocation4 [shape = 's32[1]{0}', space=sflag, size = 0x4, scoped, tag = 'scoped memory for tpu_custom_call.1']
    #allocation5 [shape = 'u8[131072]{0}', space=vmem, size = 0x20000, scoped, tag = 'input window, operand 1, single buffered']
    #allocation6 [shape = 's32[1]{0}', space=sflag, size = 0x4, scoped, tag = 'scoped memory for tpu_custom_call.1']
    #allocation7 [shape = 'u8[16384]{0}', space=vmem, size = 0x4000, scoped, tag = 'output window, operand 0, single buffered']
    %8 = vsyncpa [#allocation3], 0
    %9 = vsyncpa [#allocation6], 0
    %10 = vsyncpa [#allocation4], 0
    // Predicated region
    $region2: #{tpu_custom_call.1} parent=1 // pred_check
      _
    $region3: #{tpu_custom_call.1} parent=1 // pred_check_branch
      %12 = sbr.rel (0) target = $region5
    $region4: #{tpu_custom_call.1} parent=1 // pred_region
      %s14 = ssub.s32 1024, 1024
      %15 = vsyncadd [#allocation3], %s14
      %s16 = sshll.u32 [#allocation2], 4
      %s17 = int_to_ptr.vmem [resolvable:$true] %s16
      %22 = dma.hbm_to_vmem [thread:$0]  %s0, 1024, %s17, [#allocation3], 256, 256, 16
    $region5: #{tpu_custom_call.1} parent=1 // pred_fallthru
      _
    // Predicated region
    $region6: #{tpu_custom_call.1} parent=1 // pred_check
      _
    $region7: #{tpu_custom_call.1} parent=1 // pred_check_branch
      %24 = sbr.rel (0) target = $region9
    $region8: #{tpu_custom_call.1} parent=1 // pred_region
      %s26 = ssub.s32 4096, 4096
      %27 = vsyncadd [#allocation6], %s26
      %s28 = sshll.u32 [#allocation5], 4
      %s29 = int_to_ptr.vmem [resolvable:$true] %s28
      %34 = dma.hbm_to_vmem [thread:$0]  %s1, 4096, %s29, [#allocation6], 128, 128, 8
    $region9: #{tpu_custom_call.1} parent=1 // pred_fallthru
      _
    // Predicated region
    $region10: #{tpu_custom_call.1} parent=1 // pred_check
      _
    $region11: #{tpu_custom_call.1} parent=1 // pred_check_branch
      %36 = sbr.rel (0) target = $region13
    $region12: #{tpu_custom_call.1} parent=1 // pred_region
      _
    $region13: #{tpu_custom_call.1} parent=1 // pred_fallthru
      _
    // Predicated region
    $region14: #{tpu_custom_call.1} parent=1 // pred_check
      _
    $region15: #{tpu_custom_call.1} parent=1 // pred_check_branch
      %38 = sbr.rel (0) target = $region17
    $region16: #{tpu_custom_call.1} parent=1 // pred_region
      %39 = dma.done [#allocation3], 1024
    $region17: #{tpu_custom_call.1} parent=1 // pred_fallthru
      _
    // Predicated region
    $region18: #{tpu_custom_call.1} parent=1 // pred_check
      _
    $region19: #{tpu_custom_call.1} parent=1 // pred_check_branch
      %41 = sbr.rel (0) target = $region21
    $region20: #{tpu_custom_call.1} parent=1 // pred_region
      %42 = dma.done [#allocation6], 4096
    $region21: #{tpu_custom_call.1} parent=1 // pred_fallthru
      _
    %v43 = vld [vmem:[#allocation2] sm:$0xff]
    %v44 = vld [vmem:[#allocation2 + $0x8] sm:$0xff]
    %v45 = vld [vmem:[#allocation2 + $0x10] sm:$0xff]
    %v46 = vld [vmem:[#allocation2 + $0x18] sm:$0xff]
    %v47 = vld [vmem:[#allocation2 + $0x20] sm:$0xff]
    %v48 = vld [vmem:[#allocation2 + $0x28] sm:$0xff]
    %v49 = vld [vmem:[#allocation2 + $0x30] sm:$0xff]
    %v50 = vld [vmem:[#allocation2 + $0x38] sm:$0xff]
    %v51 = vld [vmem:[#allocation5] sm:$0xff]
    %v52 = vld [vmem:[#allocation5 + $0x8] sm:$0xff]
    %v53 = vld [vmem:[#allocation5 + $0x10] sm:$0xff]
    %v54 = vld [vmem:[#allocation5 + $0x18] sm:$0xff]
    %v55 = vld [vmem:[#allocation5 + $0x20] sm:$0xff]
    %v56 = vld [vmem:[#allocation5 + $0x28] sm:$0xff]
    %v57 = vld [vmem:[#allocation5 + $0x30] sm:$0xff]
    %v58 = vld [vmem:[#allocation5 + $0x38] sm:$0xff]
    %v59 = vld [vmem:[#allocation5 + $0x40] sm:$0xff]
    %v60 = vld [vmem:[#allocation5 + $0x48] sm:$0xff]
    %v61 = vld [vmem:[#allocation5 + $0x50] sm:$0xff]
    %v62 = vld [vmem:[#allocation5 + $0x58] sm:$0xff]
    %v63 = vld [vmem:[#allocation5 + $0x60] sm:$0xff]
    %v64 = vld [vmem:[#allocation5 + $0x68] sm:$0xff]
    %v65 = vld [vmem:[#allocation5 + $0x70] sm:$0xff]
    %v66 = vld [vmem:[#allocation5 + $0x78] sm:$0xff]
    %v67 = vld [vmem:[#allocation5 + $0x80] sm:$0xff]
    %v68 = vld [vmem:[#allocation5 + $0x88] sm:$0xff]
    %v69 = vld [vmem:[#allocation5 + $0x90] sm:$0xff]
    %v70 = vld [vmem:[#allocation5 + $0x98] sm:$0xff]
    %v71 = vld [vmem:[#allocation5 + $0xa0] sm:$0xff]
    %v72 = vld [vmem:[#allocation5 + $0xa8] sm:$0xff]
    %v73 = vld [vmem:[#allocation5 + $0xb0] sm:$0xff]
    %v74 = vld [vmem:[#allocation5 + $0xb8] sm:$0xff]
    %v75 = vld [vmem:[#allocation5 + $0xc0] sm:$0xff]
    %v76 = vld [vmem:[#allocation5 + $0xc8] sm:$0xff]
    %v77 = vld [vmem:[#allocation5 + $0xd0] sm:$0xff]
    %v78 = vld [vmem:[#allocation5 + $0xd8] sm:$0xff]
    %v79 = vld [vmem:[#allocation5 + $0xe0] sm:$0xff]
    %v80 = vld [vmem:[#allocation5 + $0xe8] sm:$0xff]
    %v81 = vld [vmem:[#allocation5 + $0xf0] sm:$0xff]
    %v82 = vld [vmem:[#allocation5 + $0xf8] sm:$0xff]
    %v83 = vld [vmem:[%s2] sm:$0x1]
    %v85 = vlaneseq
    %v86 = vshrl.u32 %v85, 7
    %v87 = vsub.s32 0, %v86
    %v88 = vrot.slane %v83, %v87
    %90 = vmatprep.subr.mxu0 0.0
    %91 = vmatpush1.msra.mxu0 %v66
    %92 = vmatprep.subr.mxu0 0.0
    %93 = vmatpush1.msra.mxu0 %v65
    %94 = vmatprep.subr.mxu0 0.0
    %95 = vmatpush1.msra.mxu0 %v64
    %96 = vmatprep.subr.mxu0 0.0
    %97 = vmatpush1.msra.mxu0 %v63
    %98 = vmatprep.subr.mxu0 0.0
    %99 = vmatpush1.msra.mxu0 %v62
    %100 = vmatprep.subr.mxu0 0.0
    %101 = vmatpush1.msra.mxu0 %v61
    %102 = vmatprep.subr.mxu0 0.0
    %103 = vmatpush1.msra.mxu0 %v60
    %104 = vmatprep.subr.mxu0 0.0
    %105 = vmatpush1.msra.mxu0 %v59
    %106 = vmatprep.subr.mxu0 0.0
    %107 = vmatpush1.msra.mxu0 %v58
    %108 = vmatprep.subr.mxu0 0.0
    %109 = vmatpush1.msra.mxu0 %v57
    %110 = vmatprep.subr.mxu0 0.0
    %111 = vmatpush1.msra.mxu0 %v56
    %112 = vmatprep.subr.mxu0 0.0
    %113 = vmatpush1.msra.mxu0 %v55
    %114 = vmatprep.subr.mxu0 0.0
    %115 = vmatpush1.msra.mxu0 %v54
    %116 = vmatprep.subr.mxu0 0.0
    %117 = vmatpush1.msra.mxu0 %v53
    %118 = vmatprep.subr.mxu0 0.0
    %119 = vmatpush1.msra.mxu0 %v52
    %120 = vmatprep.subr.mxu0 0.0
    %121 = vmatpush1.msra.mxu0 %v51
    %122 = vmatprep.subr.mxu0 0.0
    %123 = vmatpush2.msra.mxu0 %v82
    %124 = vmatprep.subr.mxu0 0.0
    %125 = vmatpush2.msra.mxu0 %v81
    %126 = vmatprep.subr.mxu0 0.0
    %127 = vmatpush2.msra.mxu0 %v80
    %128 = vmatprep.subr.mxu0 0.0
    %129 = vmatpush2.msra.mxu0 %v79
    %130 = vmatprep.subr.mxu0 0.0
    %131 = vmatpush2.msra.mxu0 %v78
    %132 = vmatprep.subr.mxu0 0.0
    %133 = vmatpush2.msra.mxu0 %v77
    %134 = vmatprep.subr.mxu0 0.0
    %135 = vmatpush2.msra.mxu0 %v76
    %136 = vmatprep.subr.mxu0 0.0
    %137 = vmatpush2.msra.mxu0 %v75
    %138 = vmatprep.subr.mxu0 0.0
    %139 = vmatpush2.msra.mxu0 %v74
    %140 = vmatprep.subr.mxu0 0.0
    %141 = vmatpush2.msra.mxu0 %v73
    %142 = vmatprep.subr.mxu0 0.0
    %143 = vmatpush2.msra.mxu0 %v72
    %144 = vmatprep.subr.mxu0 0.0
    %145 = vmatpush2.msra.mxu0 %v71
    %146 = vmatprep.subr.mxu0 0.0
    %147 = vmatpush2.msra.mxu0 %v70
    %148 = vmatprep.subr.mxu0 0.0
    %149 = vmatpush2.msra.mxu0 %v69
    %150 = vmatprep.subr.mxu0 0.0
    %151 = vmatpush2.msra.mxu0 %v68
    %152 = vmatprep.subr.mxu0 0.0
    %153 = vmatpush2.msra.mxu0 %v67
    %154 = vmatprep.mubr.f32.mxu0 %v44
    %155 = vmatmul.mubr.f32.gmra.mxu0 %v43
    %v156 = vpop.f32.mrf.mxu0
    %v157 = vadd.f32 %v88, %v156
    %v158 = vpop.f32.mrf.mxu0
    %159 = vmatprep.mubr.f32.mxu0 %v46
    %160 = vmatmul.mubr.f32.gmra.mxu0 %v45
    %v161 = vpop.f32.mrf.mxu0
    %v162 = vadd.f32 %v88, %v161
    %v163 = vpop.f32.mrf.mxu0
    %164 = vmatprep.mubr.f32.mxu0 %v48
    %165 = vmatmul.mubr.f32.gmra.mxu0 %v47
    %v166 = vpop.f32.mrf.mxu0
    %v167 = vadd.f32 %v88, %v166
    %v168 = vpop.f32.mrf.mxu0
    %169 = vmatprep.mubr.f32.mxu0 %v50
    %170 = vmatmul.mubr.f32.gmra.mxu0 %v49
    %v171 = vpop.f32.mrf.mxu0
    %v172 = vadd.f32 %v88, %v171
    %v173 = vpop.f32.mrf.mxu0
    %174 = vdwg.mxu0
    %175 = vst [vmem:[#allocation7] sm:$0xff] %v157
    %176 = vst [vmem:[#allocation7 + $0x8] sm:$0xff] %v162
    %177 = vst [vmem:[#allocation7 + $0x10] sm:$0xff] %v167
    %178 = vst [vmem:[#allocation7 + $0x18] sm:$0xff] %v172
    // Predicated region
    $region22: #{tpu_custom_call.1} parent=1 // pred_check
      _
    $region23: #{tpu_custom_call.1} parent=1 // pred_check_branch
      %180 = sbr.rel (0) target = $region25
    $region24: #{tpu_custom_call.1} parent=1 // pred_region
      %s182 = ssub.s32 512, 512
      %183 = vsyncadd [#allocation4], %s182
      %s184 = sshll.u32 [#allocation7], 4
      %s185 = int_to_ptr.vmem [resolvable:$true] %s184
      %190 = dma.vmem_to_hbm [thread:$0]  %s185, 512, %s3, [#allocation4], 128, 128, 8
    $region25: #{tpu_custom_call.1} parent=1 // pred_fallthru
      _
    // Predicated region
    $region26: #{tpu_custom_call.1} parent=1 // pred_check
      _
    $region27: #{tpu_custom_call.1} parent=1 // pred_check_branch
      %192 = sbr.rel (0) target = $region29
    $region28: #{tpu_custom_call.1} parent=1 // pred_region
      %193 = dma.done [#allocation4], 512
    $region29: #{tpu_custom_call.1} parent=1 // pred_fallthru
      _
    %194 = vsyncpa [#allocation3], 1
    %195 = vsyncpa [#allocation6], 1
    %196 = vsyncpa [#allocation4], 1

// kernel: tpu_custom_call.1
$region0: #{tpu_custom_call.1}
  #allocation0 [shape = 'u32[]', space=smem, size = 0x4, offset = 0x4, fixed_abs, tag = 'smem constant byte address 0x4 - core index']
  #allocation1 [shape = 'u32[144,128]{1,0:T(1,128)}', space=vmem, size = 0x12000, scoped, tag = 'internal scratch']
  %s0 = inlined_call_operand.hbm [shape: f32[32,256], index: 0, kind: input, shape index: {}]
  %s1 = inlined_call_operand.hbm [shape: f32[256,128], index: 1, kind: input, shape index: {}]
  %s2 = inlined_call_operand.vmem [shape: f32[1,128], index: 2, kind: input, shape index: {}]
  %s3 = inlined_call_operand.hbm [shape: f32[32,128], index: 3, kind: output, shape index: {}]
  %s4 = sld [smem:[#allocation0]]
  $region30: #{tpu_custom_call.1} parent=0
    _
  %s6 = ssub.s32 1, %s4
  %s7 = scalar_select 0, %s6, %s4
  $region1: #{tpu_custom_call.1} parent=0
    #allocation2 [shape = 'u8[32768]{0}', space=vmem, size = 0x8000, scoped, tag = 'input window, operand 0, single buffered']
    #allocation3 [shape = 's32[1]{0}', space=sflag, size = 0x4, scoped, tag = 'scoped memory for tpu_custom_call.1']
    #allocation4 [shape = 's32[1]{0}', space=sflag, size = 0x4, scoped, tag = 'scoped memory for tpu_custom_call.1']
    #allocation5 [shape = 'u8[131072]{0}', space=vmem, size = 0x20000, scoped, tag = 'input window, operand 1, single buffered']
    #allocation6 [shape = 's32[1]{0}', space=sflag, size = 0x4, scoped, tag = 'scoped memory for tpu_custom_call.1']
    #allocation7 [shape = 'u8[16384]{0}', space=vmem, size = 0x4000, scoped, tag = 'output window, operand 0, single buffered']
    %8 = vsyncpa [#allocation3], 0
    %9 = vsyncpa [#allocation6], 0
    %10 = vsyncpa [#allocation4], 0
    // Predicated region
    $region2: #{tpu_custom_call.1} parent=1 // pred_check
      _
    $region3: #{tpu_custom_call.1} parent=1 // pred_check_branch
      %12 = sbr.rel (0) target = $region5
    $region4: #{tpu_custom_call.1} parent=1 // pred_region
      %s14 = ssub.s32 1024, 1024
      %15 = vsyncadd [#allocation3], %s14
      %s16 = sshll.u32 [#allocation2], 4
      %s17 = int_to_ptr.vmem [resolvable:$true] %s16
      %22 = dma.hbm_to_vmem [thread:$0]  %s0, 1024, %s17, [#allocation3], 256, 256, 16
    $region5: #{tpu_custom_call.1} parent=1 // pred_fallthru
      _
    // Predicated region
    $region6: #{tpu_custom_call.1} parent=1 // pred_check
      _
    $region7: #{tpu_custom_call.1} parent=1 // pred_check_branch
      %24 = sbr.rel (0) target = $region9
    $region8: #{tpu_custom_call.1} parent=1 // pred_region
      %s26 = ssub.s32 4096, 4096
      %27 = vsyncadd [#allocation6], %s26
      %s28 = sshll.u32 [#allocation5], 4
      %s29 = int_to_ptr.vmem [resolvable:$true] %s28
      %34 = dma.hbm_to_vmem [thread:$0]  %s1, 4096, %s29, [#allocation6], 128, 128, 8
    $region9: #{tpu_custom_call.1} parent=1 // pred_fallthru
      _
    // Predicated region
    $region10: #{tpu_custom_call.1} parent=1 // pred_check
      _
    $region11: #{tpu_custom_call.1} parent=1 // pred_check_branch
      %36 = sbr.rel (0) target = $region13
    $region12: #{tpu_custom_call.1} parent=1 // pred_region
      _
    $region13: #{tpu_custom_call.1} parent=1 // pred_fallthru
      _
    // Predicated region
    $region14: #{tpu_custom_call.1} parent=1 // pred_check
      _
    $region15: #{tpu_custom_call.1} parent=1 // pred_check_branch
      %38 = sbr.rel (0) target = $region17
    $region16: #{tpu_custom_call.1} parent=1 // pred_region
      %39 = dma.done [#allocation3], 1024
    $region17: #{tpu_custom_call.1} parent=1 // pred_fallthru
      _
    // Predicated region
    $region18: #{tpu_custom_call.1} parent=1 // pred_check
      _
    $region19: #{tpu_custom_call.1} parent=1 // pred_check_branch
      %41 = sbr.rel (0) target = $region21
    $region20: #{tpu_custom_call.1} parent=1 // pred_region
      %42 = dma.done [#allocation6], 4096
    $region21: #{tpu_custom_call.1} parent=1 // pred_fallthru
      _
    %v43 = vld [vmem:[#allocation2] sm:$0xff]
    %v44 = vld [vmem:[#allocation2 + $0x8] sm:$0xff]
    %v45 = vld [vmem:[#allocation2 + $0x10] sm:$0xff]
    %v46 = vld [vmem:[#allocation2 + $0x18] sm:$0xff]
    %v47 = vld [vmem:[#allocation2 + $0x20] sm:$0xff]
    %v48 = vld [vmem:[#allocation2 + $0x28] sm:$0xff]
    %v49 = vld [vmem:[#allocation2 + $0x30] sm:$0xff]
    %v50 = vld [vmem:[#allocation2 + $0x38] sm:$0xff]
    %v51 = vld [vmem:[#allocation5] sm:$0xff]
    %v52 = vld [vmem:[#allocation5 + $0x8] sm:$0xff]
    %v53 = vld [vmem:[#allocation5 + $0x10] sm:$0xff]
    %v54 = vld [vmem:[#allocation5 + $0x18] sm:$0xff]
    %v55 = vld [vmem:[#allocation5 + $0x20] sm:$0xff]
    %v56 = vld [vmem:[#allocation5 + $0x28] sm:$0xff]
    %v57 = vld [vmem:[#allocation5 + $0x30] sm:$0xff]
    %v58 = vld [vmem:[#allocation5 + $0x38] sm:$0xff]
    %v59 = vld [vmem:[#allocation5 + $0x40] sm:$0xff]
    %v60 = vld [vmem:[#allocation5 + $0x48] sm:$0xff]
    %v61 = vld [vmem:[#allocation5 + $0x50] sm:$0xff]
    %v62 = vld [vmem:[#allocation5 + $0x58] sm:$0xff]
    %v63 = vld [vmem:[#allocation5 + $0x60] sm:$0xff]
    %v64 = vld [vmem:[#allocation5 + $0x68] sm:$0xff]
    %v65 = vld [vmem:[#allocation5 + $0x70] sm:$0xff]
    %v66 = vld [vmem:[#allocation5 + $0x78] sm:$0xff]
    %v67 = vld [vmem:[#allocation5 + $0x80] sm:$0xff]
    %v68 = vld [vmem:[#allocation5 + $0x88] sm:$0xff]
    %v69 = vld [vmem:[#allocation5 + $0x90] sm:$0xff]
    %v70 = vld [vmem:[#allocation5 + $0x98] sm:$0xff]
    %v71 = vld [vmem:[#allocation5 + $0xa0] sm:$0xff]
    %v72 = vld [vmem:[#allocation5 + $0xa8] sm:$0xff]
    %v73 = vld [vmem:[#allocation5 + $0xb0] sm:$0xff]
    %v74 = vld [vmem:[#allocation5 + $0xb8] sm:$0xff]
    %v75 = vld [vmem:[#allocation5 + $0xc0] sm:$0xff]
    %v76 = vld [vmem:[#allocation5 + $0xc8] sm:$0xff]
    %v77 = vld [vmem:[#allocation5 + $0xd0] sm:$0xff]
    %v78 = vld [vmem:[#allocation5 + $0xd8] sm:$0xff]
    %v79 = vld [vmem:[#allocation5 + $0xe0] sm:$0xff]
    %v80 = vld [vmem:[#allocation5 + $0xe8] sm:$0xff]
    %v81 = vld [vmem:[#allocation5 + $0xf0] sm:$0xff]
    %v82 = vld [vmem:[#allocation5 + $0xf8] sm:$0xff]
    %v83 = vld [vmem:[%s2] sm:$0x1]
    %v85 = vlaneseq
    %v86 = vshrl.u32 %v85, 7
    %v87 = vsub.s32 0, %v86
    %v88 = vrot.slane %v83, %v87
    %90 = vmatprep.subr.mxu0 0.0
    %91 = vmatpush1.msra.mxu0 %v66
    %92 = vmatprep.subr.mxu0 0.0
    %93 = vmatpush1.msra.mxu0 %v65
    %94 = vmatprep.subr.mxu0 0.0
    %95 = vmatpush1.msra.mxu0 %v64
    %96 = vmatprep.subr.mxu0 0.0
    %97 = vmatpush1.msra.mxu0 %v63
    %98 = vmatprep.subr.mxu0 0.0
    %99 = vmatpush1.msra.mxu0 %v62
    %100 = vmatprep.subr.mxu0 0.0
    %101 = vmatpush1.msra.mxu0 %v61
    %102 = vmatprep.subr.mxu0 0.0
    %103 = vmatpush1.msra.mxu0 %v60
    %104 = vmatprep.subr.mxu0 0.0
    %105 = vmatpush1.msra.mxu0 %v59
    %106 = vmatprep.subr.mxu0 0.0
    %107 = vmatpush1.msra.mxu0 %v58
    %108 = vmatprep.subr.mxu0 0.0
    %109 = vmatpush1.msra.mxu0 %v57
    %110 = vmatprep.subr.mxu0 0.0
    %111 = vmatpush1.msra.mxu0 %v56
    %112 = vmatprep.subr.mxu0 0.0
    %113 = vmatpush1.msra.mxu0 %v55
    %114 = vmatprep.subr.mxu0 0.0
    %115 = vmatpush1.msra.mxu0 %v54
    %116 = vmatprep.subr.mxu0 0.0
    %117 = vmatpush1.msra.mxu0 %v53
    %118 = vmatprep.subr.mxu0 0.0
    %119 = vmatpush1.msra.mxu0 %v52
    %120 = vmatprep.subr.mxu0 0.0
    %121 = vmatpush1.msra.mxu0 %v51
    %122 = vmatprep.subr.mxu0 0.0
    %123 = vmatpush2.msra.mxu0 %v82
    %124 = vmatprep.subr.mxu0 0.0
    %125 = vmatpush2.msra.mxu0 %v81
    %126 = vmatprep.subr.mxu0 0.0
    %127 = vmatpush2.msra.mxu0 %v80
    %128 = vmatprep.subr.mxu0 0.0
    %129 = vmatpush2.msra.mxu0 %v79
    %130 = vmatprep.subr.mxu0 0.0
    %131 = vmatpush2.msra.mxu0 %v78
    %132 = vmatprep.subr.mxu0 0.0
    %133 = vmatpush2.msra.mxu0 %v77
    %134 = vmatprep.subr.mxu0 0.0
    %135 = vmatpush2.msra.mxu0 %v76
    %136 = vmatprep.subr.mxu0 0.0
    %137 = vmatpush2.msra.mxu0 %v75
    %138 = vmatprep.subr.mxu0 0.0
    %139 = vmatpush2.msra.mxu0 %v74
    %140 = vmatprep.subr.mxu0 0.0
    %141 = vmatpush2.msra.mxu0 %v73
    %142 = vmatprep.subr.mxu0 0.0
    %143 = vmatpush2.msra.mxu0 %v72
    %144 = vmatprep.subr.mxu0 0.0
    %145 = vmatpush2.msra.mxu0 %v71
    %146 = vmatprep.subr.mxu0 0.0
    %147 = vmatpush2.msra.mxu0 %v70
    %148 = vmatprep.subr.mxu0 0.0
    %149 = vmatpush2.msra.mxu0 %v69
    %150 = vmatprep.subr.mxu0 0.0
    %151 = vmatpush2.msra.mxu0 %v68
    %152 = vmatprep.subr.mxu0 0.0
    %153 = vmatpush2.msra.mxu0 %v67
    %154 = vmatprep.mubr.f32.mxu0 %v44
    %155 = vmatmul.mubr.f32.gmra.mxu0 %v43
    %v156 = vpop.f32.mrf.mxu0
    %v157 = vadd.f32 %v88, %v156
    %v158 = vpop.f32.mrf.mxu0
    %159 = vmatprep.mubr.f32.mxu0 %v46
    %160 = vmatmul.mubr.f32.gmra.mxu0 %v45
    %v161 = vpop.f32.mrf.mxu0
    %v162 = vadd.f32 %v88, %v161
    %v163 = vpop.f32.mrf.mxu0
    %164 = vmatprep.mubr.f32.mxu0 %v48
    %165 = vmatmul.mubr.f32.gmra.mxu0 %v47
    %v166 = vpop.f32.mrf.mxu0
    %v167 = vadd.f32 %v88, %v166
    %v168 = vpop.f32.mrf.mxu0
    %169 = vmatprep.mubr.f32.mxu0 %v50
    %170 = vmatmul.mubr.f32.gmra.mxu0 %v49
    %v171 = vpop.f32.mrf.mxu0
    %v172 = vadd.f32 %v88, %v171
    %v173 = vpop.f32.mrf.mxu0
    %174 = vdwg.mxu0
    %175 = vst [vmem:[#allocation7] sm:$0xff] %v157
    %176 = vst [vmem:[#allocation7 + $0x8] sm:$0xff] %v162
    %177 = vst [vmem:[#allocation7 + $0x10] sm:$0xff] %v167
    %178 = vst [vmem:[#allocation7 + $0x18] sm:$0xff] %v172
    // Predicated region
    $region22: #{tpu_custom_call.1} parent=1 // pred_check
      _
    $region23: #{tpu_custom_call.1} parent=1 // pred_check_branch
      %180 = sbr.rel (0) target = $region25
    $region24: #{tpu_custom_call.1} parent=1 // pred_region
      %s182 = ssub.s32 512, 512
      %183 = vsyncadd [#allocation4], %s182
      %s184 = sshll.u32 [#allocation7], 4
      %s185 = int_to_ptr.vmem [resolvable:$true] %s184
      %190 = dma.vmem_to_hbm [thread:$0]  %s185, 512, %s3, [#allocation4], 128, 128, 8
    $region25: #{tpu_custom_call.1} parent=1 // pred_fallthru
      _
    // Predicated region
    $region26: #{tpu_custom_call.1} parent=1 // pred_check
      _
    $region27: #{tpu_custom_call.1} parent=1 // pred_check_branch
      %192 = sbr.rel (0) target = $region29
    $region28: #{tpu_custom_call.1} parent=1 // pred_region
      %193 = dma.done [#allocation4], 512
    $region29: #{tpu_custom_call.1} parent=1 // pred_fallthru
      _
    %194 = vsyncpa [#allocation3], 1
    %195 = vsyncpa [#allocation6], 1
    %196 = vsyncpa [#allocation4], 1

</llo_original>
